<compile_context>
chip_gen: v7x
topology: tpu7x:2x2x1
jax: 0.10.0
libtpu: 0.0.40
codegen_flags: <defaults>
</compile_context>

<pallas_src>
import functools

import jax
import jax.numpy as jnp
from jax.experimental import pallas as pl
from jax.experimental.pallas import tpu as pltpu

PAD_INDEX_LABEL = -1


def _round_up(x, m):
    return ((x + m - 1) // m) * m


def _ner_ce_kernel(logits_ref, target_ref, loss_sum_ref, *,
                   seq_len, s_tile, mask_tail):
    # logits_ref  : (B_TILE, C, S_TILE) logits block, native (B, C, S) layout,
    #               S on the 128-lane axis, C on sublanes.
    # target_ref  : (B_TILE, 1, S_TILE) int32 labels (-1 = pad).
    # loss_sum_ref: (B_TILE, 1, 1) f32 accumulator, resident across the S grid
    #               axis (output block index constant along that axis).
    s_idx = pl.program_id(1)

    @pl.when(s_idx == 0)
    def _():
        loss_sum_ref[...] = jnp.zeros_like(loss_sum_ref)

    logits = logits_ref[...].astype(jnp.float32)          # (B_TILE, C, S_TILE)
    target = target_ref[...]                              # (B_TILE, 1, S_TILE)

    valid = target != PAD_INDEX_LABEL                     # (B_TILE, 1, S_TILE)
    if mask_tail:
        # Logits/target are NOT padded in HBM; the last S block over-covers the
        # array and its tail lanes contain garbage.  Columns are independent,
        # so masking them out of the final select is sufficient.
        col = jax.lax.broadcasted_iota(jnp.int32, target.shape, 2) + s_idx * s_tile
        valid = jnp.logical_and(valid, col < seq_len)

    # Per-position cross entropy over the class (sublane) axis:
    #   logsumexp(logits) - logit[target]
    # PyTorch zeroes logits at pad positions before the CE, but those positions
    # are multiplied out by the mask afterwards, so masking once at the end via
    # a select is equivalent for finite inputs (and robust to NaN/Inf garbage in
    # the out-of-bounds tail lanes).
    m = jnp.max(logits, axis=1, keepdims=True)                               # (B_TILE, 1, S_TILE)
    lse = jnp.log(jnp.sum(jnp.exp(logits - m), axis=1, keepdims=True)) + m   # (B_TILE, 1, S_TILE)
    class_iota = jax.lax.broadcasted_iota(jnp.int32, logits.shape, 1)        # (B_TILE, C, S_TILE)
    # iota >= 0 never equals the PAD label (-1), so pads pick 0 here and are
    # fully masked by the `valid` select below.
    picked = jnp.sum(jnp.where(class_iota == target, logits, 0.0),
                     axis=1, keepdims=True)                                  # (B_TILE, 1, S_TILE)

    loss = jnp.where(valid, lse - picked, 0.0)                               # (B_TILE, 1, S_TILE)
    loss_sum_ref[...] += jnp.sum(loss, axis=2, keepdims=True)                # (B_TILE, 1, 1)


def _choose_tiles(B, C, S, itemsize):
    """Pick (b_tile, s_tile) so each grid step moves MiB-scale data but the
    double-buffered, sublane-padded VMEM footprint stays within budget."""
    pack = {4: 8, 2: 16, 1: 32}.get(itemsize, 8)
    c_in = _round_up(C, pack)     # sublane-padded input logits tile
    c_f32 = _round_up(C, 8)       # sublane-padded f32 working tile
    # Modeled VMEM bytes per (batch row x seq column):
    #   2x double-buffered inputs (padded logits + (.,1,.) target padded to 8
    #   int32 sublanes) + ~2 f32 working tiles for the logsumexp intermediates.
    col_bytes = 2 * (c_in * itemsize + 8 * 4) + 2 * c_f32 * 4
    budget = 24 * 1024 * 1024     # comfortably under the 32 MiB vmem limit below

    # Keep >=2 parallel batch blocks whenever B >= 2 (v7x megacore).
    b_cap = max(1, (B + 1) // 2)

    # Prefer full-S blocks: fully contiguous HBM reads, no ragged-S masking.
    b_full = budget // max(1, S * col_bytes)
    if b_full >= 1:
        return min(b_cap, b_full), S

    # Otherwise tile S (lane-aligned) with a modest batch block.
    b_tile = min(b_cap, 8)
    s_tile = max(128, (budget // (b_tile * col_bytes)) // 128 * 128)
    return b_tile, s_tile


@functools.partial(jax.jit, static_argnames=("b_tile", "s_tile"))
def ner_cross_entropy_loss(predicted, target, *, b_tile=None, s_tile=None):
    """predicted: (B, C, S) logits (native PyTorch layout); target: (B, S), -1 = pad."""
    B, C, S = predicted.shape
    target = target.astype(jnp.int32)

    auto_b, auto_s = _choose_tiles(B, C, S, predicted.dtype.itemsize)
    if b_tile is None:
        b_tile = auto_b
    if s_tile is None:
        s_tile = auto_s

    # Normalize tile sizes: leading (batch) dim has no alignment constraint;
    # the last block dim must be a multiple of 128 or equal the full S.
    b_tile = max(1, min(b_tile, B))
    s_tile = max(1, min(s_tile, S))
    if s_tile < S:
        s_tile = max(128, (s_tile // 128) * 128)

    num_b = (B + b_tile - 1) // b_tile
    num_s = (S + s_tile - 1) // s_tile
    mask_tail = (num_s * s_tile != S)   # ragged S coverage -> in-kernel bound mask

    target3 = target.reshape(B, 1, S)   # tiny int32 reshape; keeps (8,128) rules happy

    kernel = functools.partial(_ner_ce_kernel, seq_len=S, s_tile=s_tile,
                               mask_tail=mask_tail)

    loss_sum = pl.pallas_call(
        kernel,
        out_shape=jax.ShapeDtypeStruct((B, 1, 1), jnp.float32),
        grid=(num_b, num_s),
        in_specs=[
            pl.BlockSpec((b_tile, C, s_tile), lambda b, s: (b, 0, s)),
            pl.BlockSpec((b_tile, 1, s_tile), lambda b, s: (b, 0, s)),
        ],
        out_specs=pl.BlockSpec((b_tile, 1, 1), lambda b, s: (b, 0, 0)),
        compiler_params=pltpu.CompilerParams(
            dimension_semantics=("parallel", "arbitrary"),
            vmem_limit_bytes=32 * 1024 * 1024),
    )(predicted, target3)

    # Final tiny normalization in the wrapper: per-batch mean over valid tokens,
    # then mean over batch.  A fully-padded batch row gives mask_count == 0 ->
    # NaN/Inf, exactly like the PyTorch module.
    mask_count = jnp.sum((target != PAD_INDEX_LABEL).astype(jnp.float32), axis=1)  # (B,)
    per_batch = loss_sum[:, 0, 0] / mask_count
    return jnp.mean(per_batch)


def _reference(predicted, target):
    # Pure-JAX mirror of the PyTorch forward (native (B, C, S) layout).
    mask = (target != PAD_INDEX_LABEL).astype(jnp.float32)            # (B, S)
    logits_z = predicted.astype(jnp.float32) * mask[:, None, :]       # (B, C, S)
    target_z = jnp.where(target != PAD_INDEX_LABEL, target, 0).astype(jnp.int32)
    logp = jax.nn.log_softmax(logits_z, axis=1)                       # (B, C, S)
    picked = jnp.take_along_axis(logp, target_z[:, None, :], axis=1)[:, 0, :]
    loss_per_item = -picked * mask                                    # (B, S)
    per_batch = loss_per_item.sum(axis=1) / mask.sum(axis=1)          # (B,)
    return per_batch.mean()


def _make_inputs(key, B, C, S, pad_frac=0.25, dtype=jnp.float32):
    k_logits, k_target, k_pad = jax.random.split(key, 3)
    predicted = jax.random.normal(k_logits, (B, C, S), dtype=jnp.float32).astype(dtype)
    labels = jax.random.randint(k_target, (B, S), 0, C, dtype=jnp.int32)
    pad_mask = jax.random.uniform(k_pad, (B, S)) < pad_frac
    pad_mask = pad_mask.at[:, 0].set(False)       # keep at least one valid position per row
    target = jnp.where(pad_mask, PAD_INDEX_LABEL, labels).astype(jnp.int32)
    return predicted, target


if __name__ == "__main__":
    key = jax.random.PRNGKey(0)
    k1, k2, k3, k4 = jax.random.split(key, 4)

    # Test 1: small shapes matching typical module usage (B=2, C=4, S=16);
    # auto tiles take the full-S contiguous path.
    predicted, target = _make_inputs(k1, B=2, C=4, S=16)
    loss = jax.block_until_ready(ner_cross_entropy_loss(predicted, target))
    ref = _reference(predicted, target)
    assert jnp.allclose(loss, ref, rtol=1e-5, atol=1e-5), (loss, ref)

    # Test 2: multiple S tiles with a ragged (unpadded) tail — exercises the
    # resident accumulator across S steps and the in-kernel tail mask.
    predicted2, target2 = _make_inputs(k2, B=2, C=5, S=300)
    loss2 = jax.block_until_ready(
        ner_cross_entropy_loss(predicted2, target2, s_tile=128))
    ref2 = _reference(predicted2, target2)
    assert jnp.allclose(loss2, ref2, rtol=1e-5, atol=1e-5), (loss2, ref2)

    # Test 3: ragged batch blocks + ragged S tiles (B=5 with b_tile=2).
    predicted3, target3 = _make_inputs(k3, B=5, C=9, S=300)
    loss3 = jax.block_until_ready(
        ner_cross_entropy_loss(predicted3, target3, b_tile=2, s_tile=256))
    ref3 = _reference(predicted3, target3)
    assert jnp.allclose(loss3, ref3, rtol=1e-5, atol=1e-5), (loss3, ref3)

    # Test 4: bf16 logits (halved HBM traffic; f32 math inside the kernel).
    predicted4, target4 = _make_inputs(k4, B=4, C=6, S=160, dtype=jnp.bfloat16)
    loss4 = jax.block_until_ready(ner_cross_entropy_loss(predicted4, target4))
    ref4 = _reference(predicted4, target4)
    assert jnp.allclose(loss4, ref4, rtol=1e-3, atol=1e-3), (loss4, ref4)

    print("KERNEL_OK")
</pallas_src>

<mosaic_0001>
module attributes {stable_mosaic.version = 11 : i64} {
  func.func @_ner_ce_kernel(%arg0: i32, %arg1: i32, %arg2: memref<1x4x16xf32, #tpu.memory_space<vmem>>, %arg3: memref<1x1x16xi32, #tpu.memory_space<vmem>>, %arg4: memref<1x1x1xf32, #tpu.memory_space<vmem>>) attributes {dimension_semantics = [#tpu.dimension_semantics<parallel>, #tpu.dimension_semantics<arbitrary>], iteration_bounds = array<i64: 2, 1>, scalar_prefetch = 0 : i64, scratch_operands = 0 : i64, tpu.core_type = #tpu.core_type<tc>, window_params = [{transform_indices = @transform_0, window_bounds = array<i64: 1, 4, 16>}, {transform_indices = @transform_1, window_bounds = array<i64: 1, 1, 16>}, {transform_indices = @transform_2, window_bounds = array<i64: 1, 1, 1>}]} {
    %c0_i32 = arith.constant 0 : i32
    %0 = arith.cmpi eq, %arg1, %c0_i32 : i32
    %1 = arith.extui %0 : i1 to i32
    %c0_i32_0 = arith.constant 0 : i32
    %2 = arith.cmpi ne, %1, %c0_i32_0 : i32
    scf.if %2 {
      %cst_17 = arith.constant 0.000000e+00 : f32
      %31 = vector.broadcast %cst_17 : f32 to vector<1x1x1xf32>
      %c0_18 = arith.constant 0 : index
      %c0_19 = arith.constant 0 : index
      %c0_20 = arith.constant 0 : index
      %32 = vector.load %arg4[%c0_18, %c0_19, %c0_20] : memref<1x1x1xf32, #tpu.memory_space<vmem>>, vector<1x1x1xf32>
      tpu.vector_store %arg4[%c0_18, %c0_19, %c0_20], %31 {strides = array<i32>} : memref<1x1x1xf32, #tpu.memory_space<vmem>>, vector<1x1x1xf32>,
    } else {
    }
    %c0 = arith.constant 0 : index
    %c0_1 = arith.constant 0 : index
    %c0_2 = arith.constant 0 : index
    %3 = vector.load %arg2[%c0, %c0_1, %c0_2] : memref<1x4x16xf32, #tpu.memory_space<vmem>>, vector<1x4x16xf32>
    %c0_3 = arith.constant 0 : index
    %c0_4 = arith.constant 0 : index
    %c0_5 = arith.constant 0 : index
    %4 = vector.load %arg3[%c0_3, %c0_4, %c0_5] : memref<1x1x16xi32, #tpu.memory_space<vmem>>, vector<1x1x16xi32>
    %c-1_i32 = arith.constant -1 : i32
    %5 = vector.broadcast %c-1_i32 : i32 to vector<1x1x16xi32>
    %6 = arith.cmpi ne, %4, %5 : vector<1x1x16xi32>
    %cst = arith.constant dense<0xFF800000> : vector<1x16xf32>
    %7 = vector.multi_reduction <maximumf>, %3, %cst [1] : vector<1x4x16xf32> to vector<1x16xf32>
    %8 = vector.shape_cast %7 : vector<1x16xf32> to vector<1x1x16xf32>
    %9 = vector.broadcast %8 : vector<1x1x16xf32> to vector<1x4x16xf32>
    %10 = arith.subf %3, %9 : vector<1x4x16xf32>
    %11 = math.exp %10 : vector<1x4x16xf32>
    %cst_6 = arith.constant dense<0.000000e+00> : vector<1x16xf32>
    %12 = vector.multi_reduction <add>, %11, %cst_6 [1] : vector<1x4x16xf32> to vector<1x16xf32>
    %13 = vector.shape_cast %12 : vector<1x16xf32> to vector<1x1x16xf32>
    %14 = math.log %13 : vector<1x1x16xf32>
    %15 = arith.addf %14, %8 : vector<1x1x16xf32>
    %16 = tpu.iota {dimensions = array<i32: 1>} : vector<1x4x16xi32>
    %17 = vector.broadcast %4 : vector<1x1x16xi32> to vector<1x4x16xi32>
    %18 = arith.cmpi eq, %16, %17 : vector<1x4x16xi32>
    %cst_7 = arith.constant 0.000000e+00 : f32
    %19 = vector.broadcast %cst_7 : f32 to vector<1x4x16xf32>
    %20 = arith.select %18, %3, %19 : vector<1x4x16xi1>, vector<1x4x16xf32>
    %cst_8 = arith.constant dense<0.000000e+00> : vector<1x16xf32>
    %21 = vector.multi_reduction <add>, %20, %cst_8 [1] : vector<1x4x16xf32> to vector<1x16xf32>
    %22 = vector.shape_cast %21 : vector<1x16xf32> to vector<1x1x16xf32>
    %23 = arith.subf %15, %22 : vector<1x1x16xf32>
    %cst_9 = arith.constant 0.000000e+00 : f32
    %24 = vector.broadcast %cst_9 : f32 to vector<1x1x16xf32>
    %25 = arith.select %6, %23, %24 : vector<1x1x16xi1>, vector<1x1x16xf32>
    %c0_10 = arith.constant 0 : index
    %c0_11 = arith.constant 0 : index
    %c0_12 = arith.constant 0 : index
    %26 = vector.load %arg4[%c0_10, %c0_11, %c0_12] : memref<1x1x1xf32, #tpu.memory_space<vmem>>, vector<1x1x1xf32>
    %cst_13 = arith.constant dense<0.000000e+00> : vector<1x1xf32>
    %27 = vector.multi_reduction <add>, %25, %cst_13 [2] : vector<1x1x16xf32> to vector<1x1xf32>
    %28 = vector.shape_cast %27 : vector<1x1xf32> to vector<1x1x1xf32>
    %29 = arith.addf %26, %28 : vector<1x1x1xf32>
    %c0_14 = arith.constant 0 : index
    %c0_15 = arith.constant 0 : index
    %c0_16 = arith.constant 0 : index
    %30 = vector.load %arg4[%c0_14, %c0_15, %c0_16] : memref<1x1x1xf32, #tpu.memory_space<vmem>>, vector<1x1x1xf32>
    tpu.vector_store %arg4[%c0_14, %c0_15, %c0_16], %29 {strides = array<i32>} : memref<1x1x1xf32, #tpu.memory_space<vmem>>, vector<1x1x1xf32>,
    return
  }
  func.func @transform_0(%arg0: i32, %arg1: i32) -> (i32, i32, i32) {
    %c0_i32 = arith.constant 0 : i32
    %c0_i32_0 = arith.constant 0 : i32
    return %arg0, %c0_i32, %arg1 : i32, i32, i32
  }
  func.func @transform_1(%arg0: i32, %arg1: i32) -> (i32, i32, i32) {
    %c0_i32 = arith.constant 0 : i32
    %c0_i32_0 = arith.constant 0 : i32
    return %arg0, %c0_i32, %arg1 : i32, i32, i32
  }
  func.func @transform_2(%arg0: i32, %arg1: i32) -> (i32, i32, i32) {
    %c0_i32 = arith.constant 0 : i32
    %c0_i32_0 = arith.constant 0 : i32
    %c0_i32_1 = arith.constant 0 : i32
    return %arg0, %c0_i32, %c0_i32_0 : i32, i32, i32
  }
}

</mosaic_0001>

<llo_original>
// kernel: ner_cross_entropy_loss.1
$region0: #{ner_cross_entropy_loss.1}
  #allocation0 [shape = 'u32[]', space=smem, size = 0x4, offset = 0x4, fixed_abs, tag = 'smem constant byte address 0x4 - core index']
  #allocation1 [shape = 'u32[144,128]{1,0:T(1,128)}', space=vmem, size = 0x12000, scoped, tag = 'internal scratch']
  %s0 = inlined_call_operand.hbm [shape: f32[2,4,16], index: 0, kind: input, shape index: {}]
  %s1 = inlined_call_operand.vmem [shape: s32[2,1,16], index: 1, kind: input, shape index: {}]
  %s2 = inlined_call_operand.vmem [shape: f32[2,1,1], index: 2, kind: output, shape index: {}]
  %s3 = sld [smem:[#allocation0]]
  $region49: #{ner_cross_entropy_loss.1} parent=0
    _
  %s5 = ssub.s32 1, %s3
  %s6 = scalar_select 0, %s5, %s3
  $region1: #{ner_cross_entropy_loss.1} parent=0
    #allocation2 [shape = 'u8[4096]{0}', space=vmem, size = 0x1000, scoped, tag = 'input window, operand 0']
    #allocation3 [shape = 's32[2]{0}', space=sflag, size = 0x8, scoped, tag = 'scoped memory for ner_cross_entropy_loss.1']
    %7 = vsyncpa [#allocation3], 0
    %s8 = scalar_lea.sflag [#allocation3], 1
    %9 = vsyncpa %s8, 0
    loop: start=0, step=1, limit=4
    $region2: #{ner_cross_entropy_loss.1} parent=1 // loop_pre_header
      _
    $region3: #{ner_cross_entropy_loss.1} parent=1 // loop_header
      %s11 = sphi 0, %s15
      %p12 = scmp.ge.s32.totalorder %s11, 4
      %s18 = sphi 0, %s30
      %s19 = sphi 0, %s26
      %s20 = sphi 0, %s18
      %s21 = sphi 0, %s19
      %s22 = sphi 0, %s20
      %s23 = sphi 0, %s21
      %s35 = sphi 0, %s37
      %s38 = sphi 0, %s35
      %s39 = sphi 0, %s38
      %s55 = sphi 0, %s39
      %s63 = sphi 0, %s65
      %s66 = sphi 0, %s63
      %s67 = sphi 0, %s66
      %s83 = sphi 0, %s67
      %s89 = sphi 0, %s91
      %s92 = sphi 0, %s89
      %s93 = sphi 0, %s92
      %s109 = sphi 0, %s93
    $region4: #{ner_cross_entropy_loss.1} parent=1 // loop_header_branch
      %14 = sbr.rel (%p12) target = $region8
    $region5: #{ner_cross_entropy_loss.1} parent=1 // loop_body
      %s16 = ssub.s32 %s11, 1
      %s17 = ssub.s32 %s11, 2
      %s24 = sadd.s32 1, %s19
      %p25 = scmp.ge.s32.totalorder %s24, 1
      %s26 = scalar_select %p25, 0, %s24
      %s27 = sadd.s32 1, %s18
      %s28 = scalar_select %p25, %s27, %s18
      %p29 = scmp.ge.s32.totalorder %s28, 2
      %s30 = scalar_select %p29, 0, %s28
      %s31 = ssub.s32 %s18, %s30
      %s32 = ssub.s32 %s19, %s26
      %s33 = sor.u32 %s31, %s32
      %p34 = scmp.eq.s32.totalorder %s33, 0
      %s36 = sadd.s32 %s35, 1
      %s37 = scalar_select %p34, %s35, %s36
      %p40 = pneg %p34
      %p41 = scmp.eq.s32.totalorder %s11, 1
      %p42 = por %p40, %p41
      %p43 = scmp.ne.s32.totalorder %s35, %s38
      %p44 = scmp.eq.s32.totalorder %s11, 0
      %p45 = por %p43, %p44
      %p46 = scmp.ne.s32.totalorder %s35, %s38
      %p47 = scmp.eq.s32.totalorder %s16, 1
      %p48 = por %p46, %p47
      %p49 = scmp.ne.s32.totalorder %s38, %s39
      %p50 = scmp.eq.s32.totalorder %s16, 0
      %p51 = por %p49, %p50
      %p52 = scmp.ne.s32.totalorder %s38, %s39
      %p53 = scmp.eq.s32.totalorder %s17, 1
      %p54 = por %p52, %p53
      %p56 = scmp.ne.s32.totalorder %s39, %s55
      %p57 = scmp.eq.s32.totalorder %s17, 0
      %p58 = por %p56, %p57
      %s59 = ssub.s32 %s18, %s30
      %s60 = ssub.s32 %s19, %s26
      %s61 = sor.u32 %s59, %s60
      %p62 = scmp.eq.s32.totalorder %s61, 0
      %s64 = sadd.s32 %s63, 1
      %s65 = scalar_select %p62, %s63, %s64
      %p68 = pneg %p62
      %p69 = scmp.eq.s32.totalorder %s11, 1
      %p70 = por %p68, %p69
      %p71 = scmp.ne.s32.totalorder %s63, %s66
      %p72 = scmp.eq.s32.totalorder %s11, 0
      %p73 = por %p71, %p72
      %p74 = scmp.ne.s32.totalorder %s63, %s66
      %p75 = scmp.eq.s32.totalorder %s16, 1
      %p76 = por %p74, %p75
      %p77 = scmp.ne.s32.totalorder %s66, %s67
      %p78 = scmp.eq.s32.totalorder %s16, 0
      %p79 = por %p77, %p78
      %p80 = scmp.ne.s32.totalorder %s66, %s67
      %p81 = scmp.eq.s32.totalorder %s17, 1
      %p82 = por %p80, %p81
      %p84 = scmp.ne.s32.totalorder %s67, %s83
      %p85 = scmp.eq.s32.totalorder %s17, 0
      %p86 = por %p84, %p85
      %s87 = ssub.s32 %s18, %s30
      %p88 = scmp.eq.s32.totalorder %s87, 0
      %s90 = sadd.s32 %s89, 1
      %s91 = scalar_select %p88, %s89, %s90
      %p94 = pneg %p88
      %p95 = scmp.eq.s32.totalorder %s11, 1
      %p96 = por %p94, %p95
      %p97 = scmp.ne.s32.totalorder %s89, %s92
      %p98 = scmp.eq.s32.totalorder %s11, 0
      %p99 = por %p97, %p98
      %p100 = scmp.ne.s32.totalorder %s89, %s92
      %p101 = scmp.eq.s32.totalorder %s16, 1
      %p102 = por %p100, %p101
      %p103 = scmp.ne.s32.totalorder %s92, %s93
      %p104 = scmp.eq.s32.totalorder %s16, 0
      %p105 = por %p103, %p104
      %p106 = scmp.ne.s32.totalorder %s92, %s93
      %p107 = scmp.eq.s32.totalorder %s17, 1
      %p108 = por %p106, %p107
      %p110 = scmp.ne.s32.totalorder %s93, %s109
      %p111 = scmp.eq.s32.totalorder %s17, 0
      %p112 = por %p110, %p111
      %p113 = scmp.le.s32.totalorder 1, %s11
      %p114 = scmp.lt.s32.totalorder %s11, 3
      %p115 = pnand %p113, %p114
      %p116 = pneg %p115
      // Predicated region
      $region9: #{ner_cross_entropy_loss.1} parent=5 // pred_check
        _
      $region10: #{ner_cross_entropy_loss.1} parent=5 // pred_check_branch
        %118 = sbr.rel (%p115) target = $region12
      $region11: #{ner_cross_entropy_loss.1} parent=5 // pred_region
        %s119 = ssub.s32 %s11, 1
      $region12: #{ner_cross_entropy_loss.1} parent=5 // pred_fallthru
        _
      %p120 = scmp.lt.s32.totalorder %s11, 2
      // Predicated region
      $region13: #{ner_cross_entropy_loss.1} parent=5 // pred_check
        %p121 = pneg %p120
      $region14: #{ner_cross_entropy_loss.1} parent=5 // pred_check_branch
        %123 = sbr.rel (%p121) target = $region16
      $region15: #{ner_cross_entropy_loss.1} parent=5 // pred_region
        // Predicated region
        $region17: #{ner_cross_entropy_loss.1} parent=15 // pred_check
          %p124 = pneg %p45
        $region18: #{ner_cross_entropy_loss.1} parent=15 // pred_check_branch
          %126 = sbr.rel (%p124) target = $region20
        $region19: #{ner_cross_entropy_loss.1} parent=15 // pred_region
          %s127 = sand.u32 %s35, 1
          %s128 = scalar_lea.sflag [#allocation3], %s127
          %s129 = sand.u32 %s35, 1
          %s130 = smul.addr %s129, 4
          %s131 = scalar_lea.vmem [#allocation2], %s130
          %s133 = ssub.s32 64, 64
          %134 = vsyncadd %s128, %s133
          %s135 = sadd.s32 %s19, %s18
          %s136 = smul.addr %s135, 64
          %s137 = scalar_lea.hbm %s0, %s136
          %s139 = sshll.u32 %s131, 4
          %s140 = int_to_ptr.vmem [resolvable:$true] %s139
          %142 = dma.hbm_to_vmem [thread:$0]  %s137, 64, %s140, %s128
        $region20: #{ner_cross_entropy_loss.1} parent=15 // pred_fallthru
          _
        // Predicated region
        $region21: #{ner_cross_entropy_loss.1} parent=15 // pred_check
          %p143 = pneg %p73
        $region22: #{ner_cross_entropy_loss.1} parent=15 // pred_check_branch
          %145 = sbr.rel (%p143) target = $region24
        $region23: #{ner_cross_entropy_loss.1} parent=15 // pred_region
          %p146 = scmp.lt.s32.totalorder %s18, 1
          %s147 = scalar_select %p146, %s18, 1
          %p148 = scmp.lt.s32.totalorder %s19, 0
          %s149 = scalar_select %p148, %s19, 0
          %s150 = sadd.s32 %s149, %s147
          %s151 = scalar_lea.vmem %s1, %s150
        $region24: #{ner_cross_entropy_loss.1} parent=15 // pred_fallthru
          _
      $region16: #{ner_cross_entropy_loss.1} parent=5 // pred_fallthru
        _
      %p152 = scmp.le.s32.totalorder 1, %s11
      %p153 = scmp.lt.s32.totalorder %s11, 3
      %p154 = pnand %p152, %p153
      %p155 = pneg %p154
      // Predicated region
      $region25: #{ner_cross_entropy_loss.1} parent=5 // pred_check
        _
      $region26: #{ner_cross_entropy_loss.1} parent=5 // pred_check_branch
        %157 = sbr.rel (%p154) target = $region28
      $region27: #{ner_cross_entropy_loss.1} parent=5 // pred_region
        %s158 = ssub.s32 %s11, 1
        %s159 = sand.u32 %s38, 1
        %s160 = scalar_lea.sflag [#allocation3], %s159
        %s161 = sand.u32 %s38, 1
        %s162 = smul.addr %s161, 4
        %s163 = scalar_lea.vmem [#allocation2], %s162
        // Predicated region
        $region29: #{ner_cross_entropy_loss.1} parent=27 // pred_check
          %p164 = pneg %p51
        $region30: #{ner_cross_entropy_loss.1} parent=27 // pred_check_branch
          %166 = sbr.rel (%p164) target = $region32
        $region31: #{ner_cross_entropy_loss.1} parent=27 // pred_region
          %167 = dma.done %s160, 64
        $region32: #{ner_cross_entropy_loss.1} parent=27 // pred_fallthru
          _
        %s168 = sand.u32 %s38, 1
        %s169 = scalar_lea.sflag [#allocation3], %s168
        %s170 = sand.u32 %s38, 1
        %s171 = smul.addr %s170, 4
        %s172 = scalar_lea.vmem [#allocation2], %s171
        %p173 = pneg %p51
        %p174 = pneg %p48
        %p175 = scmp.lt.s32.totalorder %s20, 1
        %s176 = scalar_select %p175, %s20, 1
        %p177 = scmp.lt.s32.totalorder %s21, 0
        %s178 = scalar_select %p177, %s21, 0
        %s179 = sadd.s32 %s178, %s176
        %s180 = scalar_lea.vmem %s1, %s179
        %p181 = pneg %p79
        %p182 = pneg %p76
        %p183 = pneg %p105
        %p184 = pneg %p102
        %p185 = scmp.lt.s32.totalorder %s20, 1
        %s186 = scalar_select %p185, %s20, 1
        %s187 = scalar_lea.vmem %s2, %s186
        %p188 = scmp.lt.s32.totalorder %s20, 1
        %s189 = scalar_select %p188, %s20, 1
        %p190 = scmp.lt.s32.totalorder %s21, 0
        %s191 = scalar_select %p190, %s21, 0
        %s192 = sadd.s32 %s191, %s189
        %s193 = scalar_lea.vmem %s1, %s192
        %p194 = scmp.lt.s32.totalorder %s20, 1
        %s195 = scalar_select %p194, %s20, 1
        %s196 = scalar_lea.vmem %s2, %s195
        %p197 = scmp.eq.s32.totalorder %s21, 0
        // Predicated region
        $region33: #{ner_cross_entropy_loss.1} parent=27 // pred_check
          %p198 = pneg %p197
        $region34: #{ner_cross_entropy_loss.1} parent=27 // pred_check_branch
          %200 = sbr.rel (%p198) target = $region36
        $region35: #{ner_cross_entropy_loss.1} parent=27 // pred_region
          %vm201 = vcmask 0
          %202 = vst.msk [vmem:[%s196] sm:$0x1] %vm201, 0.0
        $region36: #{ner_cross_entropy_loss.1} parent=27 // pred_fallthru
          _
        %v203 = vld [vmem:[%s163] sm:$0xf]
        %v204 = vld [vmem:[%s193] sm:$0x1]
        %vm205 = vcmp.ne.s32.totalorder %v204, 4294967295
        %vm206 = vcmask 125952
        %v207 = vsel %vm206, %v203, -inf
        %v208 = vrot.slane %v207, 4
        %v209 = vmax.f32 %v207, %v208
        %v210 = vrot.slane %v209, 2
        %v211 = vmax.f32 %v209, %v210
        %v212 = vrot.slane %v211, 1
        %v213 = vmax.f32 %v211, %v212
        %v214 = vsub.f32 %v203, %v213
        %v215 = vmul.f32 %v214, 1.442695
        %v216 = vpow.pop %v215
        %v217 = vsel %vm206, %v216, 0.0
        %v218 = vrot.slane %v217, 4
        %v219 = vadd.f32 %v217, %v218
        %v220 = vrot.slane %v219, 2
        %v221 = vadd.f32 %v219, %v220
        %v222 = vrot.slane %v221, 1
        %v223 = vadd.f32 %v221, %v222
        %v224 = vlog2.pop %v223
        %v225 = vmul.f32 %v224, 0.6931472
        %v226 = vadd.f32 %v225, %v213
        %v227 = vlaneseq
        %v228 = vshrl.u32 %v227, 7
        %v229 = vlaneseq
        %v230 = vshrl.u32 %v229, 7
        %v231 = vsub.s32 0, %v230
        %v232 = vrot.slane %v204, %v231
        %vm233 = vcmp.eq.s32.totalorder %v228, %v232
        %v234 = vsel %vm233, %v203, 0.0
        %v235 = vsel %vm206, %v234, 0.0
        %v236 = vrot.slane %v235, 4
        %v237 = vadd.f32 %v235, %v236
        %v238 = vrot.slane %v237, 2
        %v239 = vadd.f32 %v237, %v238
        %v240 = vrot.slane %v239, 1
        %v241 = vadd.f32 %v239, %v240
        %v242 = vsub.f32 %v226, %v241
        %v243 = vsel %vm205, %v242, 0.0
        %v244 = vld [vmem:[%s196] sm:$0x1]
        %vm245 = vcmask 122880
        %v246 = vsel %vm245, %v243, 0.0
        %247 = vadd.xlane.f32.xlu0 %v246
        %v248 = vpop.xlane.xlu0 %247
        %v249 = vadd.f32 %v244, %v248
        %vm250 = vcmask 0
        %251 = vst.msk [vmem:[%s196] sm:$0x1] %vm250, %v249
        %p252 = scmp.lt.s32.totalorder %s20, 1
        %s253 = scalar_select %p252, %s20, 1
        %s254 = scalar_lea.vmem %s2, %s253
        // Predicated region
        $region37: #{ner_cross_entropy_loss.1} parent=27 // pred_check
          %p255 = pneg %p102
        $region38: #{ner_cross_entropy_loss.1} parent=27 // pred_check_branch
          %257 = sbr.rel (%p255) target = $region40
        $region39: #{ner_cross_entropy_loss.1} parent=27 // pred_region
          _
        $region40: #{ner_cross_entropy_loss.1} parent=27 // pred_fallthru
          _
      $region28: #{ner_cross_entropy_loss.1} parent=5 // pred_fallthru
        _
      %p258 = scmp.le.s32.totalorder 2, %s11
      // Predicated region
      $region41: #{ner_cross_entropy_loss.1} parent=5 // pred_check
        %p259 = pneg %p258
      $region42: #{ner_cross_entropy_loss.1} parent=5 // pred_check_branch
        %261 = sbr.rel (%p259) target = $region44
      $region43: #{ner_cross_entropy_loss.1} parent=5 // pred_region
        %s262 = ssub.s32 %s11, 2
        // Predicated region
        $region45: #{ner_cross_entropy_loss.1} parent=43 // pred_check
          %p263 = pneg %p108
        $region46: #{ner_cross_entropy_loss.1} parent=43 // pred_check_branch
          %265 = sbr.rel (%p263) target = $region48
        $region47: #{ner_cross_entropy_loss.1} parent=43 // pred_region
          %p266 = scmp.lt.s32.totalorder %s22, 1
          %s267 = scalar_select %p266, %s22, 1
          %s268 = scalar_lea.vmem %s2, %s267
        $region48: #{ner_cross_entropy_loss.1} parent=43 // pred_fallthru
          _
      $region44: #{ner_cross_entropy_loss.1} parent=5 // pred_fallthru
        _
    $region6: #{ner_cross_entropy_loss.1} parent=1 // loop_footer
      %s15 = sadd.s32 1, %s11
    $region7: #{ner_cross_entropy_loss.1} parent=1 // loop_footer_branch
      %10 = sbr.rel target = $region3
    $region8: #{ner_cross_entropy_loss.1} parent=1 // loop_exit
      _
    %269 = vsyncpa [#allocation3], 1
    %s270 = scalar_lea.sflag [#allocation3], 1
    %271 = vsyncpa %s270, 1

</llo_original>
